<compile_context>
chip_gen: v5e
topology: v5e:2x2
jax: 0.10.0
libtpu: 0.0.40
codegen_flags: <defaults>
</compile_context>

<pallas_src>
import jax
import jax.numpy as jnp
from jax.experimental import pallas as pl
from jax.experimental.pallas import tpu as pltpu


def se_kernel(x_ref, w1_ref, b1_ref, w2_ref, b2_ref, o_ref):
    # x_ref block: (TB, C, HW)  -- lane dim = HW (lane-dense loads/stores).
    # w1: (C_red, C), b1: (1, C_red), w2: (C, C_red), b2: (1, C)   (all f32).
    x = x_ref[...]                                           # (TB, C, HW), input dtype
    hw = x.shape[-1]

    # ---- squeeze: global average pool over spatial (lane reduce, f32 acc) ----
    s = jnp.sum(x, axis=-1, dtype=jnp.float32) * (1.0 / hw)               # (TB, C)

    # ---- excite FC1 (C -> C_red) + ReLU, on the VPU (kept off the MXU) ----
    y1 = jnp.sum(w1_ref[...][None, :, :] * s[:, None, :], axis=-1) + b1_ref[...]
    y1 = jnp.maximum(y1, 0.0)                                             # (TB, C_red)

    # ---- excite FC2 (C_red -> C) + Hsigmoid: relu6(y + 3) / 6 ----
    y2 = jnp.sum(w2_ref[...][None, :, :] * y1[:, None, :], axis=-1) + b2_ref[...]
    gate = jnp.clip(y2 + 3.0, 0.0, 6.0) * (1.0 / 6.0)                     # (TB, C)

    # ---- scale: broadcast gate over spatial, multiply in the INPUT dtype ----
    # (no live f32 copy of the block; single bf16/f32 vmul per vreg)
    o_ref[...] = (x * gate.astype(x.dtype)[:, :, None]).astype(o_ref.dtype)


def _pick_block_batch(n, per_image_bytes, target_bytes=4 << 20):
    """Images per grid step: enough bytes/step to hide per-step overhead, while
    keeping >= 2 grid steps (v7x megacore) and dividing the batch exactly."""
    tb = int(max(1, min(n, target_bytes // max(per_image_bytes, 1))))
    if n > 1:
        tb = min(tb, (n + 1) // 2)        # keep at least 2 grid steps
    while n % tb:                          # block batch must divide N
        tb -= 1
    return tb


def se_module(x_nchw, w1, b1, w2, b2):
    """Forward pass of SEModule.

    x_nchw: (N, C, H, W) in any float dtype (bf16 recommended for bandwidth).
    w1: (C_red, C)  -- Conv2d(C, C_red, 1) weight with the 1x1 kernel squeezed.
    b1: (C_red,)
    w2: (C, C_red)  -- Conv2d(C_red, C, 1) weight squeezed.
    b2: (C,)
    Returns: (N, C, H, W), same dtype as x_nchw.
    """
    N, C, H, W = x_nchw.shape
    C_red = w1.shape[0]
    HW = H * W

    # Free reshape (contiguous NCHW) -- no HBM round trip for layout.
    x = x_nchw.reshape(N, C, HW)
    w1f = w1.astype(jnp.float32)
    w2f = w2.astype(jnp.float32)
    b1r = b1.reshape(1, C_red).astype(jnp.float32)     # lane-dense row vectors
    b2r = b2.reshape(1, C).astype(jnp.float32)

    itemsize = jnp.dtype(x.dtype).itemsize
    per_image_bytes = C * HW * itemsize
    TB = _pick_block_batch(N, per_image_bytes)

    # Scoped-VMEM budget: double-buffered input + output blocks, resident
    # weights/biases, plus slack.  Clamp to the 64 MiB that is always
    # physically available (v7x floor).
    block_bytes = TB * per_image_bytes
    weight_bytes = 4 * (w1f.size + w2f.size + b1r.size + b2r.size)
    vmem_limit = int(min(max(4 * block_bytes + 2 * weight_bytes + (2 << 20),
                             32 << 20),
                         64 << 20))

    cost = pl.CostEstimate(
        flops=int(2 * N * C * HW + 4 * N * C * C_red),
        transcendentals=0,
        bytes_accessed=int(2 * N * C * HW * itemsize + weight_bytes),
    )

    out = pl.pallas_call(
        se_kernel,
        out_shape=jax.ShapeDtypeStruct((N, C, HW), x.dtype),
        grid_spec=pltpu.PrefetchScalarGridSpec(
            num_scalar_prefetch=0,
            grid=(N // TB,),
            in_specs=[
                pl.BlockSpec((TB, C, HW), lambda n: (n, 0, 0)),   # x (lane = HW)
                pl.BlockSpec((C_red, C), lambda n: (0, 0)),       # w1 (resident)
                pl.BlockSpec((1, C_red), lambda n: (0, 0)),       # b1 (row)
                pl.BlockSpec((C, C_red), lambda n: (0, 0)),       # w2 (resident)
                pl.BlockSpec((1, C), lambda n: (0, 0)),           # b2 (row)
            ],
            out_specs=pl.BlockSpec((TB, C, HW), lambda n: (n, 0, 0)),
        ),
        compiler_params=pltpu.CompilerParams(
            dimension_semantics=("parallel",),
            vmem_limit_bytes=vmem_limit,
        ),
        cost_estimate=cost,
    )(x, w1f, b1r, w2f, b2r)

    # Free reshape back to NCHW.
    return out.reshape(N, C, H, W)


if __name__ == "__main__":
    # SEModule(channel=4, act=nn.ReLU(), reduction=4)
    N, C, H, W = 2, 4, 16, 16
    reduction = 4
    C_red = C // reduction

    key = jax.random.PRNGKey(0)
    kx, k1, kb1, k2, kb2 = jax.random.split(key, 5)

    x = jax.random.normal(kx, (N, C, H, W), dtype=jnp.float32)
    # Conv2d(C, C_red, 1) weight is (C_red, C, 1, 1); keep the squeezed (C_red, C).
    w1 = jax.random.normal(k1, (C_red, C), dtype=jnp.float32) * 0.5
    b1 = jax.random.normal(kb1, (C_red,), dtype=jnp.float32) * 0.1
    w2 = jax.random.normal(k2, (C, C_red), dtype=jnp.float32) * 0.5
    b2 = jax.random.normal(kb2, (C,), dtype=jnp.float32) * 0.1

    out = se_module(x, w1, b1, w2, b2)
    jax.block_until_ready(out)

    # Pure-JAX reference of the same math (elementwise FCs -> no MXU precision
    # ambiguity in the reference itself).
    s_ref = jnp.mean(x.astype(jnp.float32), axis=(2, 3))                   # (N, C)
    y1_ref = jnp.maximum(jnp.sum(w1[None] * s_ref[:, None, :], axis=-1) + b1, 0.0)
    y2_ref = jnp.sum(w2[None] * y1_ref[:, None, :], axis=-1) + b2
    gate_ref = jnp.clip(y2_ref + 3.0, 0.0, 6.0) / 6.0                      # Hsigmoid
    ref = x * gate_ref[:, :, None, None]

    assert jnp.allclose(out, ref, atol=1e-5, rtol=1e-5), (
        "max abs err = %e" % float(jnp.max(jnp.abs(out - ref))))
    print("KERNEL_OK")
</pallas_src>

<mosaic_0001>
module attributes {stable_mosaic.version = 11 : i64} {
  func.func @se_kernel(%arg0: i32, %arg1: memref<1x4x256xf32, #tpu.memory_space<vmem>>, %arg2: memref<1x4xf32, #tpu.memory_space<vmem>>, %arg3: memref<1x1xf32, #tpu.memory_space<vmem>>, %arg4: memref<4x1xf32, #tpu.memory_space<vmem>>, %arg5: memref<1x4xf32, #tpu.memory_space<vmem>>, %arg6: memref<1x4x256xf32, #tpu.memory_space<vmem>>) attributes {dimension_semantics = [#tpu.dimension_semantics<parallel>], iteration_bounds = array<i64: 2>, scalar_prefetch = 0 : i64, scratch_operands = 0 : i64, tpu.core_type = #tpu.core_type<tc>, window_params = [{transform_indices = @transform_0, window_bounds = array<i64: 1, 4, 256>}, {pipeline_mode = #tpu.pipeline_mode<synchronous>, transform_indices = @transform_1, window_bounds = array<i64: 1, 4>}, {pipeline_mode = #tpu.pipeline_mode<synchronous>, transform_indices = @transform_2, window_bounds = array<i64: 1, 1>}, {pipeline_mode = #tpu.pipeline_mode<synchronous>, transform_indices = @transform_3, window_bounds = array<i64: 4, 1>}, {pipeline_mode = #tpu.pipeline_mode<synchronous>, transform_indices = @transform_4, window_bounds = array<i64: 1, 4>}, {transform_indices = @transform_5, window_bounds = array<i64: 1, 4, 256>}]} {
    %c0 = arith.constant 0 : index
    %c0_0 = arith.constant 0 : index
    %c0_1 = arith.constant 0 : index
    %0 = vector.load %arg1[%c0, %c0_0, %c0_1] : memref<1x4x256xf32, #tpu.memory_space<vmem>>, vector<1x4x256xf32>
    %cst = arith.constant dense<0.000000e+00> : vector<1x4xf32>
    %1 = vector.multi_reduction <add>, %0, %cst [2] : vector<1x4x256xf32> to vector<1x4xf32>
    %cst_2 = arith.constant 3.906250e-03 : f32
    %2 = vector.broadcast %cst_2 : f32 to vector<1x4xf32>
    %3 = arith.mulf %1, %2 : vector<1x4xf32>
    %c0_3 = arith.constant 0 : index
    %c0_4 = arith.constant 0 : index
    %4 = vector.load %arg2[%c0_3, %c0_4] : memref<1x4xf32, #tpu.memory_space<vmem>>, vector<1x4xf32>
    %5 = vector.shape_cast %4 : vector<1x4xf32> to vector<1x1x4xf32>
    %6 = vector.shape_cast %3 : vector<1x4xf32> to vector<1x1x4xf32>
    %7 = arith.mulf %5, %6 : vector<1x1x4xf32>
    %cst_5 = arith.constant dense<0.000000e+00> : vector<1x1xf32>
    %8 = vector.multi_reduction <add>, %7, %cst_5 [2] : vector<1x1x4xf32> to vector<1x1xf32>
    %c0_6 = arith.constant 0 : index
    %c0_7 = arith.constant 0 : index
    %9 = vector.load %arg3[%c0_6, %c0_7] : memref<1x1xf32, #tpu.memory_space<vmem>>, vector<1x1xf32>
    %10 = arith.addf %8, %9 : vector<1x1xf32>
    %cst_8 = arith.constant 0.000000e+00 : f32
    %11 = vector.broadcast %cst_8 : f32 to vector<1x1xf32>
    %12 = arith.maximumf %10, %11 : vector<1x1xf32>
    %c0_9 = arith.constant 0 : index
    %c0_10 = arith.constant 0 : index
    %13 = vector.load %arg4[%c0_9, %c0_10] : memref<4x1xf32, #tpu.memory_space<vmem>>, vector<4x1xf32>
    %14 = vector.shape_cast %13 : vector<4x1xf32> to vector<1x4x1xf32>
    %15 = vector.shape_cast %12 : vector<1x1xf32> to vector<1x1x1xf32>
    %16 = vector.broadcast %15 : vector<1x1x1xf32> to vector<1x4x1xf32>
    %17 = arith.mulf %14, %16 : vector<1x4x1xf32>
    %cst_11 = arith.constant dense<0.000000e+00> : vector<1x4xf32>
    %18 = vector.multi_reduction <add>, %17, %cst_11 [2] : vector<1x4x1xf32> to vector<1x4xf32>
    %c0_12 = arith.constant 0 : index
    %c0_13 = arith.constant 0 : index
    %19 = vector.load %arg5[%c0_12, %c0_13] : memref<1x4xf32, #tpu.memory_space<vmem>>, vector<1x4xf32>
    %20 = arith.addf %18, %19 : vector<1x4xf32>
    %cst_14 = arith.constant 3.000000e+00 : f32
    %21 = vector.broadcast %cst_14 : f32 to vector<1x4xf32>
    %22 = arith.addf %20, %21 : vector<1x4xf32>
    %cst_15 = arith.constant 0.000000e+00 : f32
    %cst_16 = arith.constant 6.000000e+00 : f32
    %23 = vector.broadcast %cst_15 : f32 to vector<1x4xf32>
    %24 = arith.maximumf %23, %22 : vector<1x4xf32>
    %25 = vector.broadcast %cst_16 : f32 to vector<1x4xf32>
    %26 = arith.minimumf %25, %24 : vector<1x4xf32>
    %cst_17 = arith.constant 0.166666672 : f32
    %27 = vector.broadcast %cst_17 : f32 to vector<1x4xf32>
    %28 = arith.mulf %26, %27 : vector<1x4xf32>
    %29 = vector.shape_cast %28 : vector<1x4xf32> to vector<1x4x1xf32>
    %30 = vector.broadcast %29 : vector<1x4x1xf32> to vector<1x4x256xf32>
    %31 = arith.mulf %0, %30 : vector<1x4x256xf32>
    %c0_18 = arith.constant 0 : index
    %c0_19 = arith.constant 0 : index
    %c0_20 = arith.constant 0 : index
    %32 = vector.load %arg6[%c0_18, %c0_19, %c0_20] : memref<1x4x256xf32, #tpu.memory_space<vmem>>, vector<1x4x256xf32>
    tpu.vector_store %arg6[%c0_18, %c0_19, %c0_20], %31 {strides = array<i32>} : memref<1x4x256xf32, #tpu.memory_space<vmem>>, vector<1x4x256xf32>,
    return
  }
  func.func @transform_0(%arg0: i32) -> (i32, i32, i32) {
    %c0_i32 = arith.constant 0 : i32
    %c0_i32_0 = arith.constant 0 : i32
    %c0_i32_1 = arith.constant 0 : i32
    return %arg0, %c0_i32, %c0_i32_0 : i32, i32, i32
  }
  func.func @transform_1(%arg0: i32) -> (i32, i32) {
    %c0_i32 = arith.constant 0 : i32
    %c0_i32_0 = arith.constant 0 : i32
    %c0_i32_1 = arith.constant 0 : i32
    return %c0_i32, %c0_i32_0 : i32, i32
  }
  func.func @transform_2(%arg0: i32) -> (i32, i32) {
    %c0_i32 = arith.constant 0 : i32
    %c0_i32_0 = arith.constant 0 : i32
    %c0_i32_1 = arith.constant 0 : i32
    return %c0_i32, %c0_i32_0 : i32, i32
  }
  func.func @transform_3(%arg0: i32) -> (i32, i32) {
    %c0_i32 = arith.constant 0 : i32
    %c0_i32_0 = arith.constant 0 : i32
    %c0_i32_1 = arith.constant 0 : i32
    return %c0_i32, %c0_i32_0 : i32, i32
  }
  func.func @transform_4(%arg0: i32) -> (i32, i32) {
    %c0_i32 = arith.constant 0 : i32
    %c0_i32_0 = arith.constant 0 : i32
    %c0_i32_1 = arith.constant 0 : i32
    return %c0_i32, %c0_i32_0 : i32, i32
  }
  func.func @transform_5(%arg0: i32) -> (i32, i32, i32) {
    %c0_i32 = arith.constant 0 : i32
    %c0_i32_0 = arith.constant 0 : i32
    %c0_i32_1 = arith.constant 0 : i32
    return %arg0, %c0_i32, %c0_i32_0 : i32, i32, i32
  }
}

</mosaic_0001>

<llo_original>
// kernel: tpu_custom_call.1
$region0: #{tpu_custom_call.1}
  #allocation0 [shape = 'u32[]', space=smem, size = 0x4, offset = 0x4, fixed_abs, tag = 'smem constant byte address 0x4 - core index']
  #allocation1 [shape = 'u32[72,128]{1,0:T(1,128)}', space=vmem, size = 0x9000, scoped, tag = 'internal scratch']
  #allocation2 [shape = 'f32[1,1]{1,0:T(1,128)S(1)}', space=vmem, size = 0x200, scoped, tag = 'scoped memory for tpu_custom_call.1']
  %s0 = inlined_call_operand.hbm [shape: f32[2,4,256], index: 0, kind: input, shape index: {}]
  %s1 = inlined_call_operand.vmem [shape: f32[1,4], index: 1, kind: input, shape index: {}]
  %s2 = inlined_call_operand.<no memory space> [shape: f32[1,1], index: 2, kind: input, shape index: {}]
  %s3 = inlined_call_operand.vmem [shape: f32[4,1], index: 3, kind: input, shape index: {}]
  %s4 = inlined_call_operand.vmem [shape: f32[1,4], index: 4, kind: input, shape index: {}]
  %s5 = inlined_call_operand.hbm [shape: f32[2,4,256], index: 5, kind: output, shape index: {}]
  %s6 = sld [smem:[#allocation0]]
  $region57: #{tpu_custom_call.1} parent=0
    _
  %s8 = ssub.s32 1, %s6
  %s9 = scalar_select 0, %s8, %s6
  %v10 = vstv %s2
  %11 = vst [vmem:[#allocation2] sm:$0x1] %v10
  $region1: #{tpu_custom_call.1} parent=0
    #allocation3 [shape = 'u8[8192]{0}', space=vmem, size = 0x2000, scoped, tag = 'input window, operand 0']
    #allocation4 [shape = 's32[2]{0}', space=sflag, size = 0x8, scoped, tag = 'scoped memory for tpu_custom_call.1']
    #allocation5 [shape = 's32[2]{0}', space=sflag, size = 0x8, scoped, tag = 'scoped memory for tpu_custom_call.1']
    #allocation6 [shape = 'u8[8192]{0}', space=vmem, size = 0x2000, scoped, tag = 'output window, operand 0']
    %12 = vsyncpa [#allocation4], 0
    %s13 = scalar_lea.sflag [#allocation4], 1
    %14 = vsyncpa %s13, 0
    %15 = vsyncpa [#allocation5], 0
    %s16 = scalar_lea.sflag [#allocation5], 1
    %17 = vsyncpa %s16, 0
    loop: start=0, step=1, limit=4
    $region2: #{tpu_custom_call.1} parent=1 // loop_pre_header
      _
    $region3: #{tpu_custom_call.1} parent=1 // loop_header
      %s19 = sphi 0, %s23
      %p20 = scmp.ge.s32.totalorder %s19, 4
      %s29 = sphi 0, %s31
      %s32 = sphi 0, %s29
      %s33 = sphi 0, %s32
      %s49 = sphi 0, %s33
      %s53 = sphi 0, %s53
      %s55 = sphi 0, %s53
      %s56 = sphi 0, %s55
      %s70 = sphi 0, %s56
      %s74 = sphi 0, %s74
      %s76 = sphi 0, %s74
      %s77 = sphi 0, %s76
      %s91 = sphi 0, %s77
      %s95 = sphi 0, %s95
      %s97 = sphi 0, %s95
      %s98 = sphi 0, %s97
      %s112 = sphi 0, %s98
      %s116 = sphi 0, %s116
      %s118 = sphi 0, %s116
      %s119 = sphi 0, %s118
      %s133 = sphi 0, %s119
      %s139 = sphi 0, %s141
      %s142 = sphi 0, %s139
      %s143 = sphi 0, %s142
      %s159 = sphi 0, %s143
    $region4: #{tpu_custom_call.1} parent=1 // loop_header_branch
      %22 = sbr.rel (%p20) target = $region8
    $region5: #{tpu_custom_call.1} parent=1 // loop_body
      %s24 = ssub.s32 %s19, 1
      %s25 = ssub.s32 %s19, 2
      %s26 = sadd.s32 %s19, 1
      %s27 = ssub.s32 %s19, %s26
      %p28 = scmp.eq.s32.totalorder %s27, 0
      %s30 = sadd.s32 %s29, 1
      %s31 = scalar_select %p28, %s29, %s30
      %p34 = pneg %p28
      %p35 = scmp.eq.s32.totalorder %s19, 1
      %p36 = por %p34, %p35
      %p37 = scmp.ne.s32.totalorder %s29, %s32
      %p38 = scmp.eq.s32.totalorder %s19, 0
      %p39 = por %p37, %p38
      %p40 = scmp.ne.s32.totalorder %s29, %s32
      %p41 = scmp.eq.s32.totalorder %s24, 1
      %p42 = por %p40, %p41
      %p43 = scmp.ne.s32.totalorder %s32, %s33
      %p44 = scmp.eq.s32.totalorder %s24, 0
      %p45 = por %p43, %p44
      %p46 = scmp.ne.s32.totalorder %s32, %s33
      %p47 = scmp.eq.s32.totalorder %s25, 1
      %p48 = por %p46, %p47
      %p50 = scmp.ne.s32.totalorder %s33, %s49
      %p51 = scmp.eq.s32.totalorder %s25, 0
      %p52 = por %p50, %p51
      %s54 = sadd.s32 %s53, 1
      %p57 = scmp.eq.s32.totalorder %s19, 1
      %p58 = scmp.ne.s32.totalorder %s53, %s55
      %p59 = scmp.eq.s32.totalorder %s19, 0
      %p60 = por %p58, %p59
      %p61 = scmp.ne.s32.totalorder %s53, %s55
      %p62 = scmp.eq.s32.totalorder %s24, 1
      %p63 = por %p61, %p62
      %p64 = scmp.ne.s32.totalorder %s55, %s56
      %p65 = scmp.eq.s32.totalorder %s24, 0
      %p66 = por %p64, %p65
      %p67 = scmp.ne.s32.totalorder %s55, %s56
      %p68 = scmp.eq.s32.totalorder %s25, 1
      %p69 = por %p67, %p68
      %p71 = scmp.ne.s32.totalorder %s56, %s70
      %p72 = scmp.eq.s32.totalorder %s25, 0
      %p73 = por %p71, %p72
      %s75 = sadd.s32 %s74, 1
      %p78 = scmp.eq.s32.totalorder %s19, 1
      %p79 = scmp.ne.s32.totalorder %s74, %s76
      %p80 = scmp.eq.s32.totalorder %s19, 0
      %p81 = por %p79, %p80
      %p82 = scmp.ne.s32.totalorder %s74, %s76
      %p83 = scmp.eq.s32.totalorder %s24, 1
      %p84 = por %p82, %p83
      %p85 = scmp.ne.s32.totalorder %s76, %s77
      %p86 = scmp.eq.s32.totalorder %s24, 0
      %p87 = por %p85, %p86
      %p88 = scmp.ne.s32.totalorder %s76, %s77
      %p89 = scmp.eq.s32.totalorder %s25, 1
      %p90 = por %p88, %p89
      %p92 = scmp.ne.s32.totalorder %s77, %s91
      %p93 = scmp.eq.s32.totalorder %s25, 0
      %p94 = por %p92, %p93
      %s96 = sadd.s32 %s95, 1
      %p99 = scmp.eq.s32.totalorder %s19, 1
      %p100 = scmp.ne.s32.totalorder %s95, %s97
      %p101 = scmp.eq.s32.totalorder %s19, 0
      %p102 = por %p100, %p101
      %p103 = scmp.ne.s32.totalorder %s95, %s97
      %p104 = scmp.eq.s32.totalorder %s24, 1
      %p105 = por %p103, %p104
      %p106 = scmp.ne.s32.totalorder %s97, %s98
      %p107 = scmp.eq.s32.totalorder %s24, 0
      %p108 = por %p106, %p107
      %p109 = scmp.ne.s32.totalorder %s97, %s98
      %p110 = scmp.eq.s32.totalorder %s25, 1
      %p111 = por %p109, %p110
      %p113 = scmp.ne.s32.totalorder %s98, %s112
      %p114 = scmp.eq.s32.totalorder %s25, 0
      %p115 = por %p113, %p114
      %s117 = sadd.s32 %s116, 1
      %p120 = scmp.eq.s32.totalorder %s19, 1
      %p121 = scmp.ne.s32.totalorder %s116, %s118
      %p122 = scmp.eq.s32.totalorder %s19, 0
      %p123 = por %p121, %p122
      %p124 = scmp.ne.s32.totalorder %s116, %s118
      %p125 = scmp.eq.s32.totalorder %s24, 1
      %p126 = por %p124, %p125
      %p127 = scmp.ne.s32.totalorder %s118, %s119
      %p128 = scmp.eq.s32.totalorder %s24, 0
      %p129 = por %p127, %p128
      %p130 = scmp.ne.s32.totalorder %s118, %s119
      %p131 = scmp.eq.s32.totalorder %s25, 1
      %p132 = por %p130, %p131
      %p134 = scmp.ne.s32.totalorder %s119, %s133
      %p135 = scmp.eq.s32.totalorder %s25, 0
      %p136 = por %p134, %p135
      %s137 = ssub.s32 %s19, %s26
      %p138 = scmp.eq.s32.totalorder %s137, 0
      %s140 = sadd.s32 %s139, 1
      %s141 = scalar_select %p138, %s139, %s140
      %p144 = pneg %p138
      %p145 = scmp.eq.s32.totalorder %s19, 1
      %p146 = por %p144, %p145
      %p147 = scmp.ne.s32.totalorder %s139, %s142
      %p148 = scmp.eq.s32.totalorder %s19, 0
      %p149 = por %p147, %p148
      %p150 = scmp.ne.s32.totalorder %s139, %s142
      %p151 = scmp.eq.s32.totalorder %s24, 1
      %p152 = por %p150, %p151
      %p153 = scmp.ne.s32.totalorder %s142, %s143
      %p154 = scmp.eq.s32.totalorder %s24, 0
      %p155 = por %p153, %p154
      %p156 = scmp.ne.s32.totalorder %s142, %s143
      %p157 = scmp.eq.s32.totalorder %s25, 1
      %p158 = por %p156, %p157
      %p160 = scmp.ne.s32.totalorder %s143, %s159
      %p161 = scmp.eq.s32.totalorder %s25, 0
      %p162 = por %p160, %p161
      %p163 = scmp.le.s32.totalorder 1, %s19
      %p164 = scmp.lt.s32.totalorder %s19, 3
      %p165 = pnand %p163, %p164
      %p166 = pneg %p165
      // Predicated region
      $region9: #{tpu_custom_call.1} parent=5 // pred_check
        _
      $region10: #{tpu_custom_call.1} parent=5 // pred_check_branch
        %168 = sbr.rel (%p165) target = $region12
      $region11: #{tpu_custom_call.1} parent=5 // pred_region
        %s169 = ssub.s32 %s19, 1
        // Predicated region
        $region13: #{tpu_custom_call.1} parent=11 // pred_check
          %p170 = pneg %p66
        $region14: #{tpu_custom_call.1} parent=11 // pred_check_branch
          %172 = sbr.rel (%p170) target = $region16
        $region15: #{tpu_custom_call.1} parent=11 // pred_region
          _
        $region16: #{tpu_custom_call.1} parent=11 // pred_fallthru
          _
        // Predicated region
        $region17: #{tpu_custom_call.1} parent=11 // pred_check
          %p173 = pneg %p87
        $region18: #{tpu_custom_call.1} parent=11 // pred_check_branch
          %175 = sbr.rel (%p173) target = $region20
        $region19: #{tpu_custom_call.1} parent=11 // pred_region
          _
        $region20: #{tpu_custom_call.1} parent=11 // pred_fallthru
          _
        // Predicated region
        $region21: #{tpu_custom_call.1} parent=11 // pred_check
          %p176 = pneg %p108
        $region22: #{tpu_custom_call.1} parent=11 // pred_check_branch
          %178 = sbr.rel (%p176) target = $region24
        $region23: #{tpu_custom_call.1} parent=11 // pred_region
          _
        $region24: #{tpu_custom_call.1} parent=11 // pred_fallthru
          _
        // Predicated region
        $region25: #{tpu_custom_call.1} parent=11 // pred_check
          %p179 = pneg %p129
        $region26: #{tpu_custom_call.1} parent=11 // pred_check_branch
          %181 = sbr.rel (%p179) target = $region28
        $region27: #{tpu_custom_call.1} parent=11 // pred_region
          _
        $region28: #{tpu_custom_call.1} parent=11 // pred_fallthru
          _
      $region12: #{tpu_custom_call.1} parent=5 // pred_fallthru
        _
      %p182 = scmp.lt.s32.totalorder %s19, 2
      // Predicated region
      $region29: #{tpu_custom_call.1} parent=5 // pred_check
        %p183 = pneg %p182
      $region30: #{tpu_custom_call.1} parent=5 // pred_check_branch
        %185 = sbr.rel (%p183) target = $region32
      $region31: #{tpu_custom_call.1} parent=5 // pred_region
        // Predicated region
        $region33: #{tpu_custom_call.1} parent=31 // pred_check
          %p186 = pneg %p39
        $region34: #{tpu_custom_call.1} parent=31 // pred_check_branch
          %188 = sbr.rel (%p186) target = $region36
        $region35: #{tpu_custom_call.1} parent=31 // pred_region
          %s189 = sand.u32 %s29, 1
          %s190 = scalar_lea.sflag [#allocation4], %s189
          %s191 = sand.u32 %s29, 1
          %s192 = smul.addr %s191, 8
          %s193 = scalar_lea.vmem [#allocation3], %s192
          %195 = vsyncadd %s190, 0
          %s196 = smul.addr %s19, 2
          %s197 = smul.addr %s196, 4
          %s198 = scalar_lea.hbm %s0, %s197
          %s200 = sshll.u32 %s198, 4
          %s201 = int_to_ptr.hbm [resolvable:$true] %s200
          %s202 = sshll.u32 %s193, 4
          %s203 = int_to_ptr.vmem [resolvable:$true] %s202
          %205 = dma.hbm_to_vmem [thread:$0]  %s201, 128, %s203, %s190
        $region36: #{tpu_custom_call.1} parent=31 // pred_fallthru
          _
      $region32: #{tpu_custom_call.1} parent=5 // pred_fallthru
        _
      %p206 = scmp.le.s32.totalorder 1, %s19
      %p207 = scmp.lt.s32.totalorder %s19, 3
      %p208 = pnand %p206, %p207
      %p209 = pneg %p208
      // Predicated region
      $region37: #{tpu_custom_call.1} parent=5 // pred_check
        _
      $region38: #{tpu_custom_call.1} parent=5 // pred_check_branch
        %211 = sbr.rel (%p208) target = $region40
      $region39: #{tpu_custom_call.1} parent=5 // pred_region
        %s212 = ssub.s32 %s19, 1
        %s213 = sand.u32 %s32, 1
        %s214 = scalar_lea.sflag [#allocation4], %s213
        %s215 = sand.u32 %s32, 1
        %s216 = smul.addr %s215, 8
        %s217 = scalar_lea.vmem [#allocation3], %s216
        // Predicated region
        $region41: #{tpu_custom_call.1} parent=39 // pred_check
          %p218 = pneg %p45
        $region42: #{tpu_custom_call.1} parent=39 // pred_check_branch
          %220 = sbr.rel (%p218) target = $region44
        $region43: #{tpu_custom_call.1} parent=39 // pred_region
          %222 = dma.done %s214, 128
        $region44: #{tpu_custom_call.1} parent=39 // pred_fallthru
          _
        %s223 = sand.u32 %s32, 1
        %s224 = scalar_lea.sflag [#allocation4], %s223
        %s225 = sand.u32 %s32, 1
        %s226 = smul.addr %s225, 8
        %s227 = scalar_lea.vmem [#allocation3], %s226
        %p228 = pneg %p45
        %p229 = pneg %p42
        %p230 = pneg %p66
        %p231 = pneg %p63
        %p232 = pneg %p87
        %p233 = pneg %p84
        %p234 = pneg %p108
        %p235 = pneg %p105
        %p236 = pneg %p129
        %p237 = pneg %p126
        %p238 = pneg %p155
        %p239 = pneg %p152
        %s240 = sand.u32 %s142, 1
        %s241 = scalar_lea.sflag [#allocation5], %s240
        %s242 = sand.u32 %s142, 1
        %s243 = smul.addr %s242, 8
        %s244 = scalar_lea.vmem [#allocation6], %s243
        %v245 = vld [vmem:[%s217] sm:$0xff]
        %247 = vst [vmem:[#allocation1] ss:$2 sm:$0xff] %v245
        %v248 = vld.sshfl [vmem:[#allocation1] sm:$0xff pattern:$0x75316420]
        %v249 = vld.sshfl [vmem:[#allocation1 + $0x8] sm:$0xff pattern:$0x75316420]
        %vm252 = vcmask 1043456
        %v253 = vsel %vm252, %v248, 0.0
        %v254 = vsel %vm252, %v249, 0.0
        %v255 = vadd.f32 %v253, %v254
        %256 = vadd.xlane.f32.xlu0 %v255
        %v257 = vpop.xlane.xlu0 %256
        %v258 = vmul.f32 %v257, 0.00390625
        %v259 = vld [vmem:[%s1] sm:$0x1]
        %v261 = vperm.slane %v258, 0
        %v262 = vperm.slane %v258, 1
        %v263 = vperm.slane %v258, 2
        %v264 = vperm.slane %v258, 3
        %265 = vst [vmem:[#allocation1] ss:$9 sm:$0xff] %v261
        %s266 = scalar_lea.vmem [#allocation1], 1
        %267 = vst [vmem:[%s266] ss:$9 sm:$0xff] %v262
        %s268 = scalar_lea.vmem [#allocation1], 2
        %269 = vst [vmem:[%s268] ss:$9 sm:$0xff] %v263
        %s270 = scalar_lea.vmem [#allocation1], 3
        %271 = vst [vmem:[%s270] ss:$9 sm:$0xff] %v264
        %v272 = vld [vmem:[#allocation1] sm:$0xff]
        %273 = vset.pattern.permute.xlu0 0
        %274 = vperm.xlu0 %273, %v272
        %v275 = vpop.permute.xlu0 %274
        %v276 = vlaneseq
        %v277 = vand.u32 %v276, 127
        %v278 = vperm.slane %v275, %v277
        %v280 = vmul.f32 %v259, %v278
        %vm281 = vcmask 24576
        %v282 = vsel %vm281, %v280, 0.0
        %283 = vadd.xlane.f32.xlu0 %v282
        %v284 = vpop.xlane.xlu0 %283
        %v285 = vld [vmem:[#allocation2] sm:$0x1]
        %v286 = vadd.f32 %v284, %v285
        %v287 = vmax.f32 %v286, 0.0
        %v288 = vld [vmem:[%s3] sm:$0xf]
        %v289 = vperm.slane %v287, 0
        %v290 = vmul.f32 %v288, %v289
        %v291 = vadd.f32 %v290, 0.0
        %v292 = vld [vmem:[%s4] sm:$0x1]
        %v294 = vperm.slane %v292, 0
        %v295 = vlaneseq
        %v296 = vshrl.u32 %v295, 7
        %298 = vset.pattern.permute.xlu0 %v296
        %299 = vperm.xlu0 %298, %v294
        %v300 = vpop.permute.xlu0 %299
        %v302 = vadd.f32 %v291, %v300
        %v303 = vadd.f32 %v302, 3.0
        %v304 = vmax.f32 %v303, 0.0
        %v305 = vmin.f32 %v304, 6.0
        %v306 = vmul.f32 %v305, 0.16666667
        %308 = vset.pattern.permute.xlu0 0
        %309 = vperm.xlu0 %308, %v306
        %v310 = vpop.permute.xlu0 %309
        %v312 = vunpack.c.l.s4 839922192
        %v313 = vunpack.c.0.s8 %v312
        %v314 = vperm.slane %v310, %v313
        %v316 = vmul.f32 %v245, %v314
        %317 = vst [vmem:[%s244] sm:$0xff] %v316
        %s318 = sand.u32 %s142, 1
        %s319 = scalar_lea.sflag [#allocation5], %s318
        %s320 = sand.u32 %s142, 1
        %s321 = smul.addr %s320, 8
        %s322 = scalar_lea.vmem [#allocation6], %s321
        // Predicated region
        $region45: #{tpu_custom_call.1} parent=39 // pred_check
          %p323 = pneg %p152
        $region46: #{tpu_custom_call.1} parent=39 // pred_check_branch
          %325 = sbr.rel (%p323) target = $region48
        $region47: #{tpu_custom_call.1} parent=39 // pred_region
          %327 = vsyncadd %s319, 0
          %s328 = smul.addr %s24, 2
          %s329 = smul.addr %s328, 4
          %s330 = scalar_lea.hbm %s5, %s329
          %s332 = sshll.u32 %s322, 4
          %s333 = int_to_ptr.vmem [resolvable:$true] %s332
          %s334 = sshll.u32 %s330, 4
          %s335 = int_to_ptr.hbm [resolvable:$true] %s334
          %337 = dma.vmem_to_hbm [thread:$0]  %s333, 128, %s335, %s319
        $region48: #{tpu_custom_call.1} parent=39 // pred_fallthru
          _
      $region40: #{tpu_custom_call.1} parent=5 // pred_fallthru
        _
      %p338 = scmp.le.s32.totalorder 2, %s19
      // Predicated region
      $region49: #{tpu_custom_call.1} parent=5 // pred_check
        %p339 = pneg %p338
      $region50: #{tpu_custom_call.1} parent=5 // pred_check_branch
        %341 = sbr.rel (%p339) target = $region52
      $region51: #{tpu_custom_call.1} parent=5 // pred_region
        %s342 = ssub.s32 %s19, 2
        // Predicated region
        $region53: #{tpu_custom_call.1} parent=51 // pred_check
          %p343 = pneg %p158
        $region54: #{tpu_custom_call.1} parent=51 // pred_check_branch
          %345 = sbr.rel (%p343) target = $region56
        $region55: #{tpu_custom_call.1} parent=51 // pred_region
          %s346 = sand.u32 %s143, 1
          %s347 = scalar_lea.sflag [#allocation5], %s346
          %s348 = sand.u32 %s143, 1
          %s349 = smul.addr %s348, 8
          %s350 = scalar_lea.vmem [#allocation6], %s349
          %352 = dma.done %s347, 128
        $region56: #{tpu_custom_call.1} parent=51 // pred_fallthru
          _
      $region52: #{tpu_custom_call.1} parent=5 // pred_fallthru
        _
    $region6: #{tpu_custom_call.1} parent=1 // loop_footer
      %s23 = sadd.s32 1, %s19
    $region7: #{tpu_custom_call.1} parent=1 // loop_footer_branch
      %18 = sbr.rel target = $region3
    $region8: #{tpu_custom_call.1} parent=1 // loop_exit
      _
    %353 = vsyncpa [#allocation4], 1
    %s354 = scalar_lea.sflag [#allocation4], 1
    %355 = vsyncpa %s354, 1
    %356 = vsyncpa [#allocation5], 1
    %s357 = scalar_lea.sflag [#allocation5], 1
    %358 = vsyncpa %s357, 1

</llo_original>
